<compile_context>
chip_gen: v7x
topology: tpu7x:2x2x1
jax: 0.10.0
libtpu: 0.0.40
codegen_flags: <defaults>
</compile_context>

<pallas_src>
import functools

import jax
import jax.numpy as jnp
from jax import lax
from jax.experimental import pallas as pl
from jax.experimental.pallas import tpu as pltpu

GN_EPS = 1e-5
NUM_GROUPS = 32


# ---------------------------------------------------------------------------
# Kernel 1a: GroupNorm statistics -> per-channel (scale, shift).
#   grid = (B, HW // t_hw); HW axis is the reduction ("arbitrary").
# ---------------------------------------------------------------------------
def gn_stats_kernel(x_ref, gamma_ref, beta_ref, gmap_ref, gmapT_ref, ss_ref,
                    sum_ref, sq_ref, *, denom):
    i = pl.program_id(1)

    @pl.when(i == 0)
    def _():
        sum_ref[...] = jnp.zeros_like(sum_ref)
        sq_ref[...] = jnp.zeros_like(sq_ref)

    x = x_ref[0]                                           # (t_hw, C) f32
    sum_ref[...] += jnp.sum(x, axis=0, keepdims=True)      # (1, C)
    sq_ref[...] += jnp.sum(x * x, axis=0, keepdims=True)   # (1, C)

    @pl.when(i == pl.num_programs(1) - 1)
    def _():
        gmap = gmap_ref[...]                               # (C, G) one-hot
        gmapT = gmapT_ref[...]                             # (G, C)
        mean_g = jnp.dot(sum_ref[...], gmap,
                         preferred_element_type=jnp.float32) / denom   # (1, G)
        ex2_g = jnp.dot(sq_ref[...], gmap,
                        preferred_element_type=jnp.float32) / denom    # (1, G)
        var_g = ex2_g - mean_g * mean_g
        inv_g = lax.rsqrt(var_g + GN_EPS)
        mean_c = jnp.dot(mean_g, gmapT, preferred_element_type=jnp.float32)  # (1, C)
        inv_c = jnp.dot(inv_g, gmapT, preferred_element_type=jnp.float32)    # (1, C)
        # Fold gamma/beta:  h = gamma*(x-mean)*inv + beta  ==  x*scale + shift
        scale = inv_c * gamma_ref[...]
        shift = beta_ref[...] - mean_c * scale
        ss_ref[0] = jnp.concatenate([scale, shift], axis=0)              # (2, C)


# ---------------------------------------------------------------------------
# Kernel 1b: apply GroupNorm affine + fused (scaled-Q)/K/V projection.
#   grid = (B, HW // t_hw); both axes parallel.
# ---------------------------------------------------------------------------
def gn_apply_qkv_kernel(x_ref, ss_ref, wqkv_ref, bqkv_ref, qkv_ref):
    x = x_ref[0]                                           # (t_hw, C) f32
    ss = ss_ref[0]                                         # (2, C) f32
    h = x * ss[0:1, :] + ss[1:2, :]                        # fused normalize+affine
    qkv = jnp.dot(h.astype(jnp.bfloat16), wqkv_ref[...],
                  preferred_element_type=jnp.float32) + bqkv_ref[...]    # (t_hw, 3C)
    qkv_ref[0] = qkv.astype(jnp.bfloat16)                  # Q already carries 1/sqrt(C)


# ---------------------------------------------------------------------------
# Kernel 2: flash-style attention + output 1x1 conv + residual.
#   grid = (B, HW // tq, HW // tkv); kv axis is the reduction ("arbitrary").
# ---------------------------------------------------------------------------
def flash_attn_proj_kernel(x_ref, q_ref, k_ref, v_ref, wp_ref, bp_ref, o_ref,
                           m_ref, l_ref, acc_ref):
    ki = pl.program_id(2)

    @pl.when(ki == 0)
    def _():
        m_ref[...] = jnp.full_like(m_ref, -jnp.inf)
        l_ref[...] = jnp.zeros_like(l_ref)
        acc_ref[...] = jnp.zeros_like(acc_ref)

    q = q_ref[0]                                           # (tq, C)  bf16 (pre-scaled)
    k = k_ref[0]                                           # (tkv, C) bf16
    # Contract the last dims of both operands -> no k.T materialization.
    s = lax.dot_general(q, k, dimension_numbers=(((1,), (1,)), ((), ())),
                        preferred_element_type=jnp.float32)              # (tq, tkv) f32

    m_prev = m_ref[...]
    m_new = jnp.maximum(m_prev, jnp.max(s, axis=-1, keepdims=True))
    alpha = jnp.exp(m_prev - m_new)
    p = jnp.exp(s - m_new)                                               # (tq, tkv) f32
    l_ref[...] = alpha * l_ref[...] + jnp.sum(p, axis=-1, keepdims=True)
    acc_ref[...] = alpha * acc_ref[...] + jnp.dot(
        p.astype(jnp.bfloat16), v_ref[0], preferred_element_type=jnp.float32)
    m_ref[...] = m_new

    @pl.when(ki == pl.num_programs(2) - 1)
    def _():
        attn = acc_ref[...] * pl.reciprocal(l_ref[...], approx=True)     # (tq, C) f32
        out = jnp.dot(attn.astype(jnp.bfloat16), wp_ref[...],
                      preferred_element_type=jnp.float32) + bp_ref[...]
        o_ref[0] = x_ref[0] + out                                         # residual (f32)


# ---------------------------------------------------------------------------
# Wrapper helpers
# ---------------------------------------------------------------------------
def _pick_tile(n, candidates):
    for t in candidates:
        if t <= n and n % t == 0:
            return t
    return n  # full extent is always a legal block dim


def _pick_parallel_tile(n, candidates, batch):
    """Like _pick_tile, but when B == 1 guarantee >=2 tiles for v7x's 2 TCs."""
    t = _pick_tile(n, candidates)
    if batch == 1 and t == n:
        half = n // 2
        if half >= 8 and half % 8 == 0:
            t = _pick_tile(half, candidates)
    return t


def _vmem_cap_bytes():
    """Per-generation scoped-VMEM ceiling (with headroom for Mosaic scratch)."""
    try:
        info = pltpu.get_tpu_info()
        cap = int(getattr(info, "vmem_capacity_bytes", 64 * 1024 * 1024))
    except Exception:  # no TPU info available: conservative default
        cap = 64 * 1024 * 1024
    return max(int(cap * 0.9), 32 * 1024 * 1024)


def _vmem_limit(working_set_bytes, cap):
    return int(min(max(2 * working_set_bytes, 32 * 1024 * 1024), cap))


# ---------------------------------------------------------------------------
# Wrapper
# ---------------------------------------------------------------------------
def attn_block(x_nchw, params):
    """x_nchw: (B, C, H, W) float32. params: dict of weights. Returns (B, C, H, W)."""
    B, C, H, W = x_nchw.shape
    HW = H * W
    G = NUM_GROUPS
    Cg = C // G
    assert C % G == 0, "GroupNorm(32, C) requires C divisible by 32"
    assert C % 128 == 0, ("C must be a multiple of 128: the fused qkv slab is "
                          "sliced into lane-aligned (.., C) blocks in kernel 2")
    assert HW % 8 == 0, "spatial extent must be sublane-aligned"

    scale = float(C) ** -0.5
    vmem_cap = _vmem_cap_bytes()

    # TODO(synk): keep the surrounding model NHWC to drop these HBM round-trips.
    x = jnp.transpose(x_nchw, (0, 2, 3, 1)).reshape(B, HW, C).astype(jnp.float32)

    # channel -> group one-hot map (and its transpose, so no in-kernel .T)
    gmap = jax.nn.one_hot(jnp.arange(C) // Cg, G, dtype=jnp.float32)     # (C, G)
    gmapT = jnp.transpose(gmap)                                          # (G, C)

    gamma = params["gamma"].reshape(1, C).astype(jnp.float32)
    beta = params["beta"].reshape(1, C).astype(jnp.float32)

    # Conv weights are (C_out, C_in); kernels compute h @ W.T, so transpose here.
    # Fuse Q/K/V into one (C, 3C) bf16 weight; fold the softmax scale into Q.
    wqkv = jnp.concatenate(
        [params["wq"].T * scale, params["wk"].T, params["wv"].T], axis=1
    ).astype(jnp.bfloat16)                                               # (C, 3C)
    bqkv = jnp.concatenate(
        [params["bq"] * scale, params["bk"], params["bv"]]
    ).reshape(1, 3 * C).astype(jnp.float32)
    wp = params["wp"].T.astype(jnp.bfloat16)                             # (C, C)
    bp = params["bp"].reshape(1, C).astype(jnp.float32)

    # ---------------- HW tiling for the GroupNorm/QKV kernels ----------------
    t_hw = _pick_parallel_tile(HW, (1024, 512, 256, 128, 64, 32, 16, 8), B)
    n_hw = HW // t_hw

    inv1 = lambda shape: pl.BlockSpec(shape, lambda b, i: (0,) * len(shape))
    x_tile_spec = pl.BlockSpec((1, t_hw, C), lambda b, i: (b, i, 0))

    # ---------------- kernel 1a: GroupNorm stats -> (scale, shift) ----------------
    vmem1a = _vmem_limit(
        2 * (t_hw * C * 4)                    # x tiles, double-buffered
        + 2 * (C * G * 4 * 2 + 2 * C * 4)     # gmap/gmapT + gamma/beta
        + 2 * 2 * C * 4 + 2 * C * 4,          # ss out + scratch
        vmem_cap)

    ss = pl.pallas_call(
        functools.partial(gn_stats_kernel, denom=float(HW * Cg)),
        out_shape=jax.ShapeDtypeStruct((B, 2, C), jnp.float32),
        grid_spec=pltpu.PrefetchScalarGridSpec(
            num_scalar_prefetch=0,
            grid=(B, n_hw),
            in_specs=[
                x_tile_spec,                  # x
                inv1((1, C)), inv1((1, C)),   # gamma, beta
                inv1((C, G)), inv1((G, C)),   # gmap, gmapT
            ],
            out_specs=pl.BlockSpec((1, 2, C), lambda b, i: (b, 0, 0)),
            scratch_shapes=[pltpu.VMEM((1, C), jnp.float32),   # per-channel sum
                            pltpu.VMEM((1, C), jnp.float32)],  # per-channel sum sq
        ),
        compiler_params=pltpu.CompilerParams(
            dimension_semantics=("parallel", "arbitrary"),
            vmem_limit_bytes=vmem1a),
    )(x, gamma, beta, gmap, gmapT)

    # ---------------- kernel 1b: normalize + fused QKV projection ----------------
    vmem1b = _vmem_limit(
        2 * (t_hw * C * 4 + t_hw * 3 * C * 2)      # x in + qkv out, double-buffered
        + 2 * (C * 3 * C * 2 + 3 * C * 4 + 2 * C * 4)  # wqkv, bqkv, ss
        + t_hw * 3 * C * 4 + t_hw * C * 4,          # f32 qkv accum + h intermediates
        vmem_cap)

    qkv = pl.pallas_call(
        gn_apply_qkv_kernel,
        out_shape=jax.ShapeDtypeStruct((B, HW, 3 * C), jnp.bfloat16),
        grid_spec=pltpu.PrefetchScalarGridSpec(
            num_scalar_prefetch=0,
            grid=(B, n_hw),
            in_specs=[
                x_tile_spec,                                        # x
                pl.BlockSpec((1, 2, C), lambda b, i: (b, 0, 0)),    # scale/shift
                inv1((C, 3 * C)), inv1((1, 3 * C)),                 # wqkv, bqkv
            ],
            out_specs=pl.BlockSpec((1, t_hw, 3 * C), lambda b, i: (b, i, 0)),
        ),
        compiler_params=pltpu.CompilerParams(
            dimension_semantics=("parallel", "parallel"),
            vmem_limit_bytes=vmem1b),
    )(x, ss, wqkv, bqkv)

    # ---------------- kernel 2: flash attention + proj + residual ----------------
    # Large tq raises K/V re-read arithmetic intensity (~tq flops/byte); cap at
    # HW/2 when B == 1 so the parallel axes still feed both v7x TensorCores.
    tq = _pick_parallel_tile(HW, (1024, 512, 256, 128, 64, 32, 16, 8), B)
    tkv = _pick_tile(HW, (512, 256, 128, 64, 32, 16, 8))
    grid = (B, HW // tq, HW // tkv)

    x_spec = pl.BlockSpec((1, tq, C), lambda b, qi, ki: (b, qi, 0))
    q_spec = pl.BlockSpec((1, tq, C), lambda b, qi, ki: (b, qi, 0))     # qkv[:, :, 0:C]
    k_spec = pl.BlockSpec((1, tkv, C), lambda b, qi, ki: (b, ki, 1))    # qkv[:, :, C:2C]
    v_spec = pl.BlockSpec((1, tkv, C), lambda b, qi, ki: (b, ki, 2))    # qkv[:, :, 2C:3C]
    full2 = lambda shape: pl.BlockSpec(shape, lambda b, qi, ki: (0,) * len(shape))

    vmem2 = _vmem_limit(
        2 * (tq * C * 4 + tq * C * 2 + 2 * tkv * C * 2 + tq * C * 4)  # x,q,k,v,out bufs
        + 2 * (C * C * 2 + C * 4)                                      # wp, bp
        + tq * C * 4 + 2 * tq * 4                                      # acc, m, l scratch
        + 4 * tq * tkv * 4,                                            # score/prob temps
        vmem_cap)

    out = pl.pallas_call(
        flash_attn_proj_kernel,
        out_shape=jax.ShapeDtypeStruct((B, HW, C), jnp.float32),
        grid_spec=pltpu.PrefetchScalarGridSpec(
            num_scalar_prefetch=0,
            grid=grid,
            in_specs=[x_spec,                      # x (residual rows)
                      q_spec, k_spec, v_spec,      # three views of the qkv slab
                      full2((C, C)),               # wp
                      full2((1, C))],              # bp
            out_specs=x_spec,
            scratch_shapes=[pltpu.VMEM((tq, 1), jnp.float32),   # m
                            pltpu.VMEM((tq, 1), jnp.float32),   # l
                            pltpu.VMEM((tq, C), jnp.float32)],  # acc
        ),
        compiler_params=pltpu.CompilerParams(
            dimension_semantics=("parallel", "parallel", "arbitrary"),
            vmem_limit_bytes=vmem2),
    )(x, qkv, qkv, qkv, wp, bp)

    return jnp.transpose(out.reshape(B, H, W, C), (0, 3, 1, 2))


# ---------------------------------------------------------------------------
# Synthetic init mirroring the PyTorch module's __init__, and a JAX reference.
# ---------------------------------------------------------------------------
def init_params(key, C):
    ks = jax.random.split(key, 4)
    limit = (6.0 / (C + C)) ** 0.5  # xavier_uniform for (C_out, C_in, 1, 1)
    xavier = lambda k: jax.random.uniform(k, (C, C), jnp.float32, -limit, limit)
    return {
        "gamma": jnp.ones((C,), jnp.float32),
        "beta": jnp.zeros((C,), jnp.float32),
        "wq": xavier(ks[0]), "bq": jnp.zeros((C,), jnp.float32),
        "wk": xavier(ks[1]), "bk": jnp.zeros((C,), jnp.float32),
        "wv": xavier(ks[2]), "bv": jnp.zeros((C,), jnp.float32),
        # final proj re-initialized with gain=1e-5
        "wp": xavier(ks[3]) * 1e-5, "bp": jnp.zeros((C,), jnp.float32),
    }


def attn_block_reference(x_nchw, params):
    """Pure-JAX (f32) reference reproducing the PyTorch forward pass."""
    B, C, H, W = x_nchw.shape
    HW = H * W
    G = NUM_GROUPS
    xg = x_nchw.reshape(B, G, C // G, H, W)
    mean = xg.mean(axis=(2, 3, 4), keepdims=True)
    var = xg.var(axis=(2, 3, 4), keepdims=True)
    h = ((xg - mean) / jnp.sqrt(var + GN_EPS)).reshape(B, C, H, W)
    h = h * params["gamma"][None, :, None, None] + params["beta"][None, :, None, None]
    conv1x1 = lambda t, w, b: jnp.einsum("bchw,oc->bohw", t, w) + b[None, :, None, None]
    q = conv1x1(h, params["wq"], params["bq"])
    k = conv1x1(h, params["wk"], params["bk"])
    v = conv1x1(h, params["wv"], params["bv"])
    q = jnp.transpose(q, (0, 2, 3, 1)).reshape(B, HW, C)
    k = k.reshape(B, C, HW)
    w_attn = jax.nn.softmax(jnp.einsum("bqc,bck->bqk", q, k) * (C ** -0.5), axis=-1)
    v = jnp.transpose(v, (0, 2, 3, 1)).reshape(B, HW, C)
    hh = jnp.einsum("bqk,bkc->bqc", w_attn, v)
    hh = jnp.transpose(hh.reshape(B, H, W, C), (0, 3, 1, 2))
    hh = conv1x1(hh, params["wp"], params["bp"])
    return x_nchw + hh


if __name__ == "__main__":
    # C must be a multiple of 32 (GroupNorm) and 128 (lane-dense QKV slicing).
    B, C, H, W = 2, 128, 8, 8
    key = jax.random.PRNGKey(0)
    kx, kp = jax.random.split(key)
    x = jax.random.normal(kx, (B, C, H, W), jnp.float32)
    params = init_params(kp, C)

    out = jax.block_until_ready(attn_block(x, params))
    ref = attn_block_reference(x, params)
    assert out.shape == (B, C, H, W)
    # Module-faithful init (proj gain 1e-5): residual dominates, tight tolerance.
    assert jnp.allclose(out, ref, rtol=1e-3, atol=1e-3), "mismatch vs reference"

    # Stronger check that actually exercises the attention/proj path
    # (bf16-MXU-level tolerance).
    params_strong = dict(params)
    params_strong["wp"] = params["wp"] / 1e-5
    out_s = jax.block_until_ready(attn_block(x, params_strong))
    ref_s = attn_block_reference(x, params_strong)
    assert jnp.allclose(out_s, ref_s, rtol=5e-2, atol=5e-2), "mismatch (strong proj)"

    print("KERNEL_OK")
</pallas_src>

<mosaic_0001>
module attributes {stable_mosaic.version = 11 : i64} {
  func.func @gn_stats_kernel(%arg0: i32, %arg1: i32, %arg2: memref<1x64x128xf32, #tpu.memory_space<vmem>>, %arg3: memref<1x128xf32, #tpu.memory_space<vmem>>, %arg4: memref<1x128xf32, #tpu.memory_space<vmem>>, %arg5: memref<128x32xf32, #tpu.memory_space<vmem>>, %arg6: memref<32x128xf32, #tpu.memory_space<vmem>>, %arg7: memref<1x2x128xf32, #tpu.memory_space<vmem>>, %arg8: memref<1x128xf32, #tpu.memory_space<vmem>>, %arg9: memref<1x128xf32, #tpu.memory_space<vmem>>) attributes {dimension_semantics = [#tpu.dimension_semantics<parallel>, #tpu.dimension_semantics<arbitrary>], iteration_bounds = array<i64: 2, 1>, scalar_prefetch = 0 : i64, scratch_operands = 2 : i64, tpu.core_type = #tpu.core_type<tc>, window_params = [{transform_indices = @transform_0, window_bounds = array<i64: 1, 64, 128>}, {pipeline_mode = #tpu.pipeline_mode<synchronous>, transform_indices = @transform_1, window_bounds = array<i64: 1, 128>}, {pipeline_mode = #tpu.pipeline_mode<synchronous>, transform_indices = @transform_2, window_bounds = array<i64: 1, 128>}, {pipeline_mode = #tpu.pipeline_mode<synchronous>, transform_indices = @transform_3, window_bounds = array<i64: 128, 32>}, {pipeline_mode = #tpu.pipeline_mode<synchronous>, transform_indices = @transform_4, window_bounds = array<i64: 32, 128>}, {transform_indices = @transform_5, window_bounds = array<i64: 1, 2, 128>}]} {
    %c0_i32 = arith.constant 0 : i32
    %0 = arith.cmpi eq, %arg1, %c0_i32 : i32
    %1 = arith.extui %0 : i1 to i32
    %c0_i32_0 = arith.constant 0 : i32
    %2 = arith.cmpi ne, %1, %c0_i32_0 : i32
    scf.if %2 {
      %cst_14 = arith.constant 0.000000e+00 : f32
      %19 = vector.broadcast %cst_14 : f32 to vector<1x128xf32>
      %c0_15 = arith.constant 0 : index
      %c0_16 = arith.constant 0 : index
      %20 = vector.load %arg8[%c0_15, %c0_16] : memref<1x128xf32, #tpu.memory_space<vmem>>, vector<1x128xf32>
      tpu.vector_store %arg8[%c0_15, %c0_16], %19 {strides = array<i32>} : memref<1x128xf32, #tpu.memory_space<vmem>>, vector<1x128xf32>,
      %cst_17 = arith.constant 0.000000e+00 : f32
      %21 = vector.broadcast %cst_17 : f32 to vector<1x128xf32>
      %c0_18 = arith.constant 0 : index
      %c0_19 = arith.constant 0 : index
      %22 = vector.load %arg9[%c0_18, %c0_19] : memref<1x128xf32, #tpu.memory_space<vmem>>, vector<1x128xf32>
      tpu.vector_store %arg9[%c0_18, %c0_19], %21 {strides = array<i32>} : memref<1x128xf32, #tpu.memory_space<vmem>>, vector<1x128xf32>,
    } else {
    }
    %c0 = arith.constant 0 : index
    %c0_1 = arith.constant 0 : index
    %c0_2 = arith.constant 0 : index
    %3 = vector.load %arg2[%c0, %c0_1, %c0_2] : memref<1x64x128xf32, #tpu.memory_space<vmem>>, vector<1x64x128xf32>
    %4 = vector.shape_cast %3 : vector<1x64x128xf32> to vector<64x128xf32>
    %c0_3 = arith.constant 0 : index
    %c0_4 = arith.constant 0 : index
    %5 = vector.load %arg8[%c0_3, %c0_4] : memref<1x128xf32, #tpu.memory_space<vmem>>, vector<1x128xf32>
    %cst = arith.constant dense<0.000000e+00> : vector<128xf32>
    %6 = vector.multi_reduction <add>, %4, %cst [0] : vector<64x128xf32> to vector<128xf32>
    %7 = vector.shape_cast %6 : vector<128xf32> to vector<1x128xf32>
    %8 = arith.addf %5, %7 : vector<1x128xf32>
    %c0_5 = arith.constant 0 : index
    %c0_6 = arith.constant 0 : index
    %9 = vector.load %arg8[%c0_5, %c0_6] : memref<1x128xf32, #tpu.memory_space<vmem>>, vector<1x128xf32>
    tpu.vector_store %arg8[%c0_5, %c0_6], %8 {strides = array<i32>} : memref<1x128xf32, #tpu.memory_space<vmem>>, vector<1x128xf32>,
    %c0_7 = arith.constant 0 : index
    %c0_8 = arith.constant 0 : index
    %10 = vector.load %arg9[%c0_7, %c0_8] : memref<1x128xf32, #tpu.memory_space<vmem>>, vector<1x128xf32>
    %11 = arith.mulf %4, %4 : vector<64x128xf32>
    %cst_9 = arith.constant dense<0.000000e+00> : vector<128xf32>
    %12 = vector.multi_reduction <add>, %11, %cst_9 [0] : vector<64x128xf32> to vector<128xf32>
    %13 = vector.shape_cast %12 : vector<128xf32> to vector<1x128xf32>
    %14 = arith.addf %10, %13 : vector<1x128xf32>
    %c0_10 = arith.constant 0 : index
    %c0_11 = arith.constant 0 : index
    %15 = vector.load %arg9[%c0_10, %c0_11] : memref<1x128xf32, #tpu.memory_space<vmem>>, vector<1x128xf32>
    tpu.vector_store %arg9[%c0_10, %c0_11], %14 {strides = array<i32>} : memref<1x128xf32, #tpu.memory_space<vmem>>, vector<1x128xf32>,
    %c0_i32_12 = arith.constant 0 : i32
    %16 = arith.cmpi eq, %arg1, %c0_i32_12 : i32
    %17 = arith.extui %16 : i1 to i32
    %c0_i32_13 = arith.constant 0 : i32
    %18 = arith.cmpi ne, %17, %c0_i32_13 : i32
    scf.if %18 {
      %c0_14 = arith.constant 0 : index
      %c0_15 = arith.constant 0 : index
      %19 = vector.load %arg5[%c0_14, %c0_15] : memref<128x32xf32, #tpu.memory_space<vmem>>, vector<128x32xf32>
      %c0_16 = arith.constant 0 : index
      %c0_17 = arith.constant 0 : index
      %20 = vector.load %arg6[%c0_16, %c0_17] : memref<32x128xf32, #tpu.memory_space<vmem>>, vector<32x128xf32>
      %c0_18 = arith.constant 0 : index
      %c0_19 = arith.constant 0 : index
      %21 = vector.load %arg8[%c0_18, %c0_19] : memref<1x128xf32, #tpu.memory_space<vmem>>, vector<1x128xf32>
      %cst_20 = arith.constant dense<0.000000e+00> : vector<1x32xf32>
      %22 = tpu.matmul %21, %19, %cst_20 {dimension_numbers = #tpu.dot_dimension_numbers<[1], [0], [0], [1], [0, 0, 1, 1], [], []>} : vector<1x128xf32>, vector<128x32xf32>, vector<1x32xf32> -> vector<1x32xf32>
      %cst_21 = arith.constant 2.560000e+02 : f32
      %23 = vector.broadcast %cst_21 : f32 to vector<1x32xf32>
      %24 = arith.divf %22, %23 : vector<1x32xf32>
      %c0_22 = arith.constant 0 : index
      %c0_23 = arith.constant 0 : index
      %25 = vector.load %arg9[%c0_22, %c0_23] : memref<1x128xf32, #tpu.memory_space<vmem>>, vector<1x128xf32>
      %cst_24 = arith.constant dense<0.000000e+00> : vector<1x32xf32>
      %26 = tpu.matmul %25, %19, %cst_24 {dimension_numbers = #tpu.dot_dimension_numbers<[1], [0], [0], [1], [0, 0, 1, 1], [], []>} : vector<1x128xf32>, vector<128x32xf32>, vector<1x32xf32> -> vector<1x32xf32>
      %cst_25 = arith.constant 2.560000e+02 : f32
      %27 = vector.broadcast %cst_25 : f32 to vector<1x32xf32>
      %28 = arith.divf %26, %27 : vector<1x32xf32>
      %29 = arith.mulf %24, %24 : vector<1x32xf32>
      %30 = arith.subf %28, %29 : vector<1x32xf32>
      %cst_26 = arith.constant 9.99999974E-6 : f32
      %31 = vector.broadcast %cst_26 : f32 to vector<1x32xf32>
      %32 = arith.addf %30, %31 : vector<1x32xf32>
      %33 = math.rsqrt %32 : vector<1x32xf32>
      %cst_27 = arith.constant dense<0.000000e+00> : vector<1x128xf32>
      %34 = tpu.matmul %24, %20, %cst_27 {dimension_numbers = #tpu.dot_dimension_numbers<[1], [0], [0], [1], [0, 0, 1, 1], [], []>} : vector<1x32xf32>, vector<32x128xf32>, vector<1x128xf32> -> vector<1x128xf32>
      %cst_28 = arith.constant dense<0.000000e+00> : vector<1x128xf32>
      %35 = tpu.matmul %33, %20, %cst_28 {dimension_numbers = #tpu.dot_dimension_numbers<[1], [0], [0], [1], [0, 0, 1, 1], [], []>} : vector<1x32xf32>, vector<32x128xf32>, vector<1x128xf32> -> vector<1x128xf32>
      %c0_29 = arith.constant 0 : index
      %c0_30 = arith.constant 0 : index
      %36 = vector.load %arg3[%c0_29, %c0_30] : memref<1x128xf32, #tpu.memory_space<vmem>>, vector<1x128xf32>
      %37 = arith.mulf %35, %36 : vector<1x128xf32>
      %c0_31 = arith.constant 0 : index
      %c0_32 = arith.constant 0 : index
      %38 = vector.load %arg4[%c0_31, %c0_32] : memref<1x128xf32, #tpu.memory_space<vmem>>, vector<1x128xf32>
      %39 = arith.mulf %34, %37 : vector<1x128xf32>
      %40 = arith.subf %38, %39 : vector<1x128xf32>
      %41 = tpu.concatenate %37, %40 in 0 : vector<1x128xf32>, vector<1x128xf32> -> vector<2x128xf32>
      %c0_33 = arith.constant 0 : index
      %c0_34 = arith.constant 0 : index
      %c0_35 = arith.constant 0 : index
      %42 = vector.load %arg7[%c0_33, %c0_34, %c0_35] : memref<1x2x128xf32, #tpu.memory_space<vmem>>, vector<1x2x128xf32>
      %43 = vector.shape_cast %42 : vector<1x2x128xf32> to vector<2x128xf32>
      %44 = vector.shape_cast %41 : vector<2x128xf32> to vector<1x2x128xf32>
      tpu.vector_store %arg7[%c0_33, %c0_34, %c0_35], %44 {strides = array<i32>} : memref<1x2x128xf32, #tpu.memory_space<vmem>>, vector<1x2x128xf32>,
    } else {
    }
    return
  }
  func.func @transform_0(%arg0: i32, %arg1: i32) -> (i32, i32, i32) {
    %c0_i32 = arith.constant 0 : i32
    %c0_i32_0 = arith.constant 0 : i32
    return %arg0, %arg1, %c0_i32 : i32, i32, i32
  }
  func.func @transform_1(%arg0: i32, %arg1: i32) -> (i32, i32) {
    %c0_i32 = arith.constant 0 : i32
    %c0_i32_0 = arith.constant 0 : i32
    %c0_i32_1 = arith.constant 0 : i32
    return %c0_i32, %c0_i32_0 : i32, i32
  }
  func.func @transform_2(%arg0: i32, %arg1: i32) -> (i32, i32) {
    %c0_i32 = arith.constant 0 : i32
    %c0_i32_0 = arith.constant 0 : i32
    %c0_i32_1 = arith.constant 0 : i32
    return %c0_i32, %c0_i32_0 : i32, i32
  }
  func.func @transform_3(%arg0: i32, %arg1: i32) -> (i32, i32) {
    %c0_i32 = arith.constant 0 : i32
    %c0_i32_0 = arith.constant 0 : i32
    %c0_i32_1 = arith.constant 0 : i32
    return %c0_i32, %c0_i32_0 : i32, i32
  }
  func.func @transform_4(%arg0: i32, %arg1: i32) -> (i32, i32) {
    %c0_i32 = arith.constant 0 : i32
    %c0_i32_0 = arith.constant 0 : i32
    %c0_i32_1 = arith.constant 0 : i32
    return %c0_i32, %c0_i32_0 : i32, i32
  }
  func.func @transform_5(%arg0: i32, %arg1: i32) -> (i32, i32, i32) {
    %c0_i32 = arith.constant 0 : i32
    %c0_i32_0 = arith.constant 0 : i32
    %c0_i32_1 = arith.constant 0 : i32
    return %arg0, %c0_i32, %c0_i32_0 : i32, i32, i32
  }
}

</mosaic_0001>

<llo_original>
// kernel: tpu_custom_call.1
$region0: #{tpu_custom_call.1}
  #allocation0 [shape = 'u32[]', space=smem, size = 0x4, offset = 0x4, fixed_abs, tag = 'smem constant byte address 0x4 - core index']
  #allocation1 [shape = 'u32[144,128]{1,0:T(1,128)}', space=vmem, size = 0x12000, scoped, tag = 'internal scratch']
  #allocation2 [shape = 'f32[1,128]{1,0:T(1,128)}', space=vmem, size = 0x200, scoped, tag = 'scratch operand']
  #allocation3 [shape = 'f32[1,128]{1,0:T(1,128)}', space=vmem, size = 0x200, scoped, tag = 'scratch operand']
  %s0 = inlined_call_operand.vmem [shape: f32[2,64,128], index: 0, kind: input, shape index: {}]
  %s1 = inlined_call_operand.vmem [shape: f32[1,128], index: 1, kind: input, shape index: {}]
  %s2 = inlined_call_operand.vmem [shape: f32[1,128], index: 2, kind: input, shape index: {}]
  %s3 = inlined_call_operand.vmem [shape: f32[128,32], index: 3, kind: input, shape index: {}]
  %s4 = inlined_call_operand.vmem [shape: f32[32,128], index: 4, kind: input, shape index: {}]
  %s5 = inlined_call_operand.hbm [shape: f32[2,2,128], index: 5, kind: output, shape index: {}]
  %s6 = sld [smem:[#allocation0]]
  $region61: #{tpu_custom_call.1} parent=0
    _
  %s8 = ssub.s32 1, %s6
  %s9 = scalar_select 0, %s8, %s6
  $region1: #{tpu_custom_call.1} parent=0
    #allocation4 [shape = 'u8[2048]{0}', space=vmem, size = 0x800, scoped, tag = 'output window, operand 0']
    #allocation5 [shape = 's32[2]{0}', space=sflag, size = 0x8, scoped, tag = 'scoped memory for tpu_custom_call.1']
    %10 = vsyncpa [#allocation5], 0
    %s11 = scalar_lea.sflag [#allocation5], 1
    %12 = vsyncpa %s11, 0
    loop: start=0, step=1, limit=4
    $region2: #{tpu_custom_call.1} parent=1 // loop_pre_header
      _
    $region3: #{tpu_custom_call.1} parent=1 // loop_header
      %s14 = sphi 0, %s18
      %p15 = scmp.ge.s32.totalorder %s14, 4
      %s21 = sphi 0, %s33
      %s22 = sphi 0, %s29
      %s23 = sphi 0, %s21
      %s24 = sphi 0, %s22
      %s25 = sphi 0, %s23
      %s26 = sphi 0, %s24
      %s38 = sphi 0, %s40
      %s41 = sphi 0, %s38
      %s42 = sphi 0, %s41
      %s58 = sphi 0, %s42
      %s62 = sphi 0, %s62
      %s64 = sphi 0, %s62
      %s65 = sphi 0, %s64
      %s79 = sphi 0, %s65
      %s83 = sphi 0, %s83
      %s85 = sphi 0, %s83
      %s86 = sphi 0, %s85
      %s100 = sphi 0, %s86
      %s104 = sphi 0, %s104
      %s106 = sphi 0, %s104
      %s107 = sphi 0, %s106
      %s121 = sphi 0, %s107
      %s125 = sphi 0, %s125
      %s127 = sphi 0, %s125
      %s128 = sphi 0, %s127
      %s142 = sphi 0, %s128
      %s148 = sphi 0, %s150
      %s151 = sphi 0, %s148
      %s152 = sphi 0, %s151
      %s168 = sphi 0, %s152
    $region4: #{tpu_custom_call.1} parent=1 // loop_header_branch
      %17 = sbr.rel (%p15) target = $region8
    $region5: #{tpu_custom_call.1} parent=1 // loop_body
      %s19 = ssub.s32 %s14, 1
      %s20 = ssub.s32 %s14, 2
      %s27 = sadd.s32 1, %s22
      %p28 = scmp.ge.s32.totalorder %s27, 1
      %s29 = scalar_select %p28, 0, %s27
      %s30 = sadd.s32 1, %s21
      %s31 = scalar_select %p28, %s30, %s21
      %p32 = scmp.ge.s32.totalorder %s31, 2
      %s33 = scalar_select %p32, 0, %s31
      %s34 = ssub.s32 %s21, %s33
      %s35 = ssub.s32 %s22, %s29
      %s36 = sor.u32 %s34, %s35
      %p37 = scmp.eq.s32.totalorder %s36, 0
      %s39 = sadd.s32 %s38, 1
      %s40 = scalar_select %p37, %s38, %s39
      %p43 = pneg %p37
      %p44 = scmp.eq.s32.totalorder %s14, 1
      %p45 = por %p43, %p44
      %p46 = scmp.ne.s32.totalorder %s38, %s41
      %p47 = scmp.eq.s32.totalorder %s14, 0
      %p48 = por %p46, %p47
      %p49 = scmp.ne.s32.totalorder %s38, %s41
      %p50 = scmp.eq.s32.totalorder %s19, 1
      %p51 = por %p49, %p50
      %p52 = scmp.ne.s32.totalorder %s41, %s42
      %p53 = scmp.eq.s32.totalorder %s19, 0
      %p54 = por %p52, %p53
      %p55 = scmp.ne.s32.totalorder %s41, %s42
      %p56 = scmp.eq.s32.totalorder %s20, 1
      %p57 = por %p55, %p56
      %p59 = scmp.ne.s32.totalorder %s42, %s58
      %p60 = scmp.eq.s32.totalorder %s20, 0
      %p61 = por %p59, %p60
      %s63 = sadd.s32 %s62, 1
      %p66 = scmp.eq.s32.totalorder %s14, 1
      %p67 = scmp.ne.s32.totalorder %s62, %s64
      %p68 = scmp.eq.s32.totalorder %s14, 0
      %p69 = por %p67, %p68
      %p70 = scmp.ne.s32.totalorder %s62, %s64
      %p71 = scmp.eq.s32.totalorder %s19, 1
      %p72 = por %p70, %p71
      %p73 = scmp.ne.s32.totalorder %s64, %s65
      %p74 = scmp.eq.s32.totalorder %s19, 0
      %p75 = por %p73, %p74
      %p76 = scmp.ne.s32.totalorder %s64, %s65
      %p77 = scmp.eq.s32.totalorder %s20, 1
      %p78 = por %p76, %p77
      %p80 = scmp.ne.s32.totalorder %s65, %s79
      %p81 = scmp.eq.s32.totalorder %s20, 0
      %p82 = por %p80, %p81
      %s84 = sadd.s32 %s83, 1
      %p87 = scmp.eq.s32.totalorder %s14, 1
      %p88 = scmp.ne.s32.totalorder %s83, %s85
      %p89 = scmp.eq.s32.totalorder %s14, 0
      %p90 = por %p88, %p89
      %p91 = scmp.ne.s32.totalorder %s83, %s85
      %p92 = scmp.eq.s32.totalorder %s19, 1
      %p93 = por %p91, %p92
      %p94 = scmp.ne.s32.totalorder %s85, %s86
      %p95 = scmp.eq.s32.totalorder %s19, 0
      %p96 = por %p94, %p95
      %p97 = scmp.ne.s32.totalorder %s85, %s86
      %p98 = scmp.eq.s32.totalorder %s20, 1
      %p99 = por %p97, %p98
      %p101 = scmp.ne.s32.totalorder %s86, %s100
      %p102 = scmp.eq.s32.totalorder %s20, 0
      %p103 = por %p101, %p102
      %s105 = sadd.s32 %s104, 1
      %p108 = scmp.eq.s32.totalorder %s14, 1
      %p109 = scmp.ne.s32.totalorder %s104, %s106
      %p110 = scmp.eq.s32.totalorder %s14, 0
      %p111 = por %p109, %p110
      %p112 = scmp.ne.s32.totalorder %s104, %s106
      %p113 = scmp.eq.s32.totalorder %s19, 1
      %p114 = por %p112, %p113
      %p115 = scmp.ne.s32.totalorder %s106, %s107
      %p116 = scmp.eq.s32.totalorder %s19, 0
      %p117 = por %p115, %p116
      %p118 = scmp.ne.s32.totalorder %s106, %s107
      %p119 = scmp.eq.s32.totalorder %s20, 1
      %p120 = por %p118, %p119
      %p122 = scmp.ne.s32.totalorder %s107, %s121
      %p123 = scmp.eq.s32.totalorder %s20, 0
      %p124 = por %p122, %p123
      %s126 = sadd.s32 %s125, 1
      %p129 = scmp.eq.s32.totalorder %s14, 1
      %p130 = scmp.ne.s32.totalorder %s125, %s127
      %p131 = scmp.eq.s32.totalorder %s14, 0
      %p132 = por %p130, %p131
      %p133 = scmp.ne.s32.totalorder %s125, %s127
      %p134 = scmp.eq.s32.totalorder %s19, 1
      %p135 = por %p133, %p134
      %p136 = scmp.ne.s32.totalorder %s127, %s128
      %p137 = scmp.eq.s32.totalorder %s19, 0
      %p138 = por %p136, %p137
      %p139 = scmp.ne.s32.totalorder %s127, %s128
      %p140 = scmp.eq.s32.totalorder %s20, 1
      %p141 = por %p139, %p140
      %p143 = scmp.ne.s32.totalorder %s128, %s142
      %p144 = scmp.eq.s32.totalorder %s20, 0
      %p145 = por %p143, %p144
      %s146 = ssub.s32 %s21, %s33
      %p147 = scmp.eq.s32.totalorder %s146, 0
      %s149 = sadd.s32 %s148, 1
      %s150 = scalar_select %p147, %s148, %s149
      %p153 = pneg %p147
      %p154 = scmp.eq.s32.totalorder %s14, 1
      %p155 = por %p153, %p154
      %p156 = scmp.ne.s32.totalorder %s148, %s151
      %p157 = scmp.eq.s32.totalorder %s14, 0
      %p158 = por %p156, %p157
      %p159 = scmp.ne.s32.totalorder %s148, %s151
      %p160 = scmp.eq.s32.totalorder %s19, 1
      %p161 = por %p159, %p160
      %p162 = scmp.ne.s32.totalorder %s151, %s152
      %p163 = scmp.eq.s32.totalorder %s19, 0
      %p164 = por %p162, %p163
      %p165 = scmp.ne.s32.totalorder %s151, %s152
      %p166 = scmp.eq.s32.totalorder %s20, 1
      %p167 = por %p165, %p166
      %p169 = scmp.ne.s32.totalorder %s152, %s168
      %p170 = scmp.eq.s32.totalorder %s20, 0
      %p171 = por %p169, %p170
      %p172 = scmp.le.s32.totalorder 1, %s14
      %p173 = scmp.lt.s32.totalorder %s14, 3
      %p174 = pnand %p172, %p173
      %p175 = pneg %p174
      // Predicated region
      $region9: #{tpu_custom_call.1} parent=5 // pred_check
        _
      $region10: #{tpu_custom_call.1} parent=5 // pred_check_branch
        %177 = sbr.rel (%p174) target = $region12
      $region11: #{tpu_custom_call.1} parent=5 // pred_region
        %s178 = ssub.s32 %s14, 1
        // Predicated region
        $region13: #{tpu_custom_call.1} parent=11 // pred_check
          %p179 = pneg %p75
        $region14: #{tpu_custom_call.1} parent=11 // pred_check_branch
          %181 = sbr.rel (%p179) target = $region16
        $region15: #{tpu_custom_call.1} parent=11 // pred_region
          _
        $region16: #{tpu_custom_call.1} parent=11 // pred_fallthru
          _
        // Predicated region
        $region17: #{tpu_custom_call.1} parent=11 // pred_check
          %p182 = pneg %p96
        $region18: #{tpu_custom_call.1} parent=11 // pred_check_branch
          %184 = sbr.rel (%p182) target = $region20
        $region19: #{tpu_custom_call.1} parent=11 // pred_region
          _
        $region20: #{tpu_custom_call.1} parent=11 // pred_fallthru
          _
        // Predicated region
        $region21: #{tpu_custom_call.1} parent=11 // pred_check
          %p185 = pneg %p117
        $region22: #{tpu_custom_call.1} parent=11 // pred_check_branch
          %187 = sbr.rel (%p185) target = $region24
        $region23: #{tpu_custom_call.1} parent=11 // pred_region
          _
        $region24: #{tpu_custom_call.1} parent=11 // pred_fallthru
          _
        // Predicated region
        $region25: #{tpu_custom_call.1} parent=11 // pred_check
          %p188 = pneg %p138
        $region26: #{tpu_custom_call.1} parent=11 // pred_check_branch
          %190 = sbr.rel (%p188) target = $region28
        $region27: #{tpu_custom_call.1} parent=11 // pred_region
          _
        $region28: #{tpu_custom_call.1} parent=11 // pred_fallthru
          _
      $region12: #{tpu_custom_call.1} parent=5 // pred_fallthru
        _
      %p191 = scmp.lt.s32.totalorder %s14, 2
      // Predicated region
      $region29: #{tpu_custom_call.1} parent=5 // pred_check
        %p192 = pneg %p191
      $region30: #{tpu_custom_call.1} parent=5 // pred_check_branch
        %194 = sbr.rel (%p192) target = $region32
      $region31: #{tpu_custom_call.1} parent=5 // pred_region
        // Predicated region
        $region33: #{tpu_custom_call.1} parent=31 // pred_check
          %p195 = pneg %p48
        $region34: #{tpu_custom_call.1} parent=31 // pred_check_branch
          %197 = sbr.rel (%p195) target = $region36
        $region35: #{tpu_custom_call.1} parent=31 // pred_region
          %s198 = smul.u32 8, %s22
          %p199 = scmp.lt.s32.totalorder %s21, 1
          %s200 = scalar_select %p199, %s21, 1
          %p201 = scmp.lt.s32.totalorder %s198, 7
          %s202 = scalar_select %p201, %s198, 7
          %s203 = smul.addr %s200, 8
          %s204 = sadd.s32 %s202, %s203
          %s205 = smul.addr %s204, 8
          %s206 = scalar_lea.vmem %s0, %s205
          %s207 = smul.u32 8, %s22
        $region36: #{tpu_custom_call.1} parent=31 // pred_fallthru
          _
      $region32: #{tpu_custom_call.1} parent=5 // pred_fallthru
        _
      %p208 = scmp.le.s32.totalorder 1, %s14
      %p209 = scmp.lt.s32.totalorder %s14, 3
      %p210 = pnand %p208, %p209
      %p211 = pneg %p210
      // Predicated region
      $region37: #{tpu_custom_call.1} parent=5 // pred_check
        _
      $region38: #{tpu_custom_call.1} parent=5 // pred_check_branch
        %213 = sbr.rel (%p210) target = $region40
      $region39: #{tpu_custom_call.1} parent=5 // pred_region
        %s214 = ssub.s32 %s14, 1
        %s215 = smul.u32 8, %s24
        %p216 = scmp.lt.s32.totalorder %s23, 1
        %s217 = scalar_select %p216, %s23, 1
        %p218 = scmp.lt.s32.totalorder %s215, 7
        %s219 = scalar_select %p218, %s215, 7
        %s220 = smul.addr %s217, 8
        %s221 = sadd.s32 %s219, %s220
        %s222 = smul.addr %s221, 8
        %s223 = scalar_lea.vmem %s0, %s222
        %p224 = pneg %p54
        %p225 = pneg %p51
        %p226 = pneg %p75
        %p227 = pneg %p72
        %p228 = pneg %p96
        %p229 = pneg %p93
        %p230 = pneg %p117
        %p231 = pneg %p114
        %p232 = pneg %p138
        %p233 = pneg %p135
        %p234 = pneg %p164
        %p235 = pneg %p161
        %s236 = sand.u32 %s151, 1
        %s237 = scalar_lea.sflag [#allocation5], %s236
        %s238 = sand.u32 %s151, 1
        %s239 = smul.addr %s238, 2
        %s240 = scalar_lea.vmem [#allocation4], %s239
        %s241 = smul.u32 8, %s24
        %p242 = scmp.lt.s32.totalorder %s23, 1
        %s243 = scalar_select %p242, %s23, 1
        %p244 = scmp.lt.s32.totalorder %s241, 7
        %s245 = scalar_select %p244, %s241, 7
        %s246 = smul.addr %s243, 8
        %s247 = sadd.s32 %s245, %s246
        %s248 = smul.addr %s247, 8
        %s249 = scalar_lea.vmem %s0, %s248
        %s250 = smul.u32 8, %s24
        %p251 = scmp.eq.s32.totalorder %s24, 0
        // Predicated region
        $region41: #{tpu_custom_call.1} parent=39 // pred_check
          %p252 = pneg %p251
        $region42: #{tpu_custom_call.1} parent=39 // pred_check_branch
          %254 = sbr.rel (%p252) target = $region44
        $region43: #{tpu_custom_call.1} parent=39 // pred_region
          %255 = vst [vmem:[#allocation2] sm:$0x1] 0.0
          %256 = vst [vmem:[#allocation3] sm:$0x1] 0.0
        $region44: #{tpu_custom_call.1} parent=39 // pred_fallthru
          _
        %v257 = vld [vmem:[%s249] sm:$0xff]
        %v258 = vld [vmem:[%s249 + $0x8] sm:$0xff]
        %v259 = vld [vmem:[%s249 + $0x10] sm:$0xff]
        %v260 = vld [vmem:[%s249 + $0x18] sm:$0xff]
        %v261 = vld [vmem:[%s249 + $0x20] sm:$0xff]
        %v262 = vld [vmem:[%s249 + $0x28] sm:$0xff]
        %v263 = vld [vmem:[%s249 + $0x30] sm:$0xff]
        %v264 = vld [vmem:[%s249 + $0x38] sm:$0xff]
        %v265 = vld [vmem:[#allocation2] sm:$0x1]
        %v266 = vadd.f32 %v257, %v258
        %v267 = vadd.f32 %v266, %v259
        %v268 = vadd.f32 %v267, %v260
        %v269 = vadd.f32 %v268, %v261
        %v270 = vadd.f32 %v269, %v262
        %v271 = vadd.f32 %v270, %v263
        %v272 = vadd.f32 %v271, %v264
        %v273 = vrot.slane %v272, 4
        %v274 = vadd.f32 %v272, %v273
        %v275 = vrot.slane %v274, 2
        %v276 = vadd.f32 %v274, %v275
        %v277 = vrot.slane %v276, 1
        %v278 = vadd.f32 %v276, %v277
        %v279 = vadd.f32 %v265, %v278
        %280 = vst [vmem:[#allocation2] sm:$0x1] %v279
        %v281 = vld [vmem:[#allocation3] sm:$0x1]
        %v282 = vmul.f32 %v257, %v257
        %v283 = vmul.f32 %v258, %v258
        %v284 = vmul.f32 %v259, %v259
        %v285 = vmul.f32 %v260, %v260
        %v286 = vmul.f32 %v261, %v261
        %v287 = vmul.f32 %v262, %v262
        %v288 = vmul.f32 %v263, %v263
        %v289 = vmul.f32 %v264, %v264
        %v290 = vadd.f32 %v282, %v283
        %v291 = vadd.f32 %v290, %v284
        %v292 = vadd.f32 %v291, %v285
        %v293 = vadd.f32 %v292, %v286
        %v294 = vadd.f32 %v293, %v287
        %v295 = vadd.f32 %v294, %v288
        %v296 = vadd.f32 %v295, %v289
        %v297 = vrot.slane %v296, 4
        %v298 = vadd.f32 %v296, %v297
        %v299 = vrot.slane %v298, 2
        %v300 = vadd.f32 %v298, %v299
        %v301 = vrot.slane %v300, 1
        %v302 = vadd.f32 %v300, %v301
        %v303 = vadd.f32 %v281, %v302
        %304 = vst [vmem:[#allocation3] sm:$0x1] %v303
        // Predicated region
        $region45: #{tpu_custom_call.1} parent=39 // pred_check
          %p305 = pneg %p251
        $region46: #{tpu_custom_call.1} parent=39 // pred_check_branch
          %307 = sbr.rel (%p305) target = $region48
        $region47: #{tpu_custom_call.1} parent=39 // pred_region
          %v308 = vld [vmem:[%s3] sm:$0xff]
          %v309 = vld [vmem:[%s3 + $0x8] sm:$0xff]
          %v310 = vld [vmem:[%s3 + $0x10] sm:$0xff]
          %v311 = vld [vmem:[%s3 + $0x18] sm:$0xff]
          %v312 = vld [vmem:[%s3 + $0x20] sm:$0xff]
          %v313 = vld [vmem:[%s3 + $0x28] sm:$0xff]
          %v314 = vld [vmem:[%s3 + $0x30] sm:$0xff]
          %v315 = vld [vmem:[%s3 + $0x38] sm:$0xff]
          %v316 = vld [vmem:[%s3 + $0x40] sm:$0xff]
          %v317 = vld [vmem:[%s3 + $0x48] sm:$0xff]
          %v318 = vld [vmem:[%s3 + $0x50] sm:$0xff]
          %v319 = vld [vmem:[%s3 + $0x58] sm:$0xff]
          %v320 = vld [vmem:[%s3 + $0x60] sm:$0xff]
          %v321 = vld [vmem:[%s3 + $0x68] sm:$0xff]
          %v322 = vld [vmem:[%s3 + $0x70] sm:$0xff]
          %v323 = vld [vmem:[%s3 + $0x78] sm:$0xff]
          %v324 = vld [vmem:[%s4] sm:$0xff]
          %v325 = vld [vmem:[%s4 + $0x8] sm:$0xff]
          %v326 = vld [vmem:[%s4 + $0x10] sm:$0xff]
          %v327 = vld [vmem:[%s4 + $0x18] sm:$0xff]
          %v328 = vld [vmem:[#allocation2] sm:$0x1]
          %329 = vmatprep.subr.mxu0 0.0
          %330 = vmatpush1.msra.mxu0 %v308
          %331 = vmatprep.subr.mxu0 0.0
          %332 = vmatpush1.msra.mxu0 %v309
          %333 = vmatprep.subr.mxu0 0.0
          %334 = vmatpush1.msra.mxu0 %v310
          %335 = vmatprep.subr.mxu0 0.0
          %336 = vmatpush1.msra.mxu0 %v311
          %337 = vmatprep.subr.mxu0 0.0
          %338 = vmatpush1.msra.mxu0 %v312
          %339 = vmatprep.subr.mxu0 0.0
          %340 = vmatpush1.msra.mxu0 %v313
          %341 = vmatprep.subr.mxu0 0.0
          %342 = vmatpush1.msra.mxu0 %v314
          %343 = vmatprep.subr.mxu0 0.0
          %344 = vmatpush1.msra.mxu0 %v315
          %345 = vmatprep.subr.mxu0 0.0
          %346 = vmatpush1.msra.mxu0 %v316
          %347 = vmatprep.subr.mxu0 0.0
          %348 = vmatpush1.msra.mxu0 %v317
          %349 = vmatprep.subr.mxu0 0.0
          %350 = vmatpush1.msra.mxu0 %v318
          %351 = vmatprep.subr.mxu0 0.0
          %352 = vmatpush1.msra.mxu0 %v319
          %353 = vmatprep.subr.mxu0 0.0
          %354 = vmatpush1.msra.mxu0 %v320
          %355 = vmatprep.subr.mxu0 0.0
          %356 = vmatpush1.msra.mxu0 %v321
          %357 = vmatprep.subr.mxu0 0.0
          %358 = vmatpush1.msra.mxu0 %v322
          %359 = vmatprep.subr.mxu0 0.0
          %360 = vmatpush1.msra.mxu0 %v323
          %361 = vmatprep.subr.mxu0 0.0
          %362 = vmatpush1.msra.mxu0 0.0
          %363 = vmatprep.subr.mxu0 0.0
          %364 = vmatpush1.msra.mxu0 0.0
          %365 = vmatprep.subr.mxu0 0.0
          %366 = vmatpush1.msra.mxu0 0.0
          %367 = vmatprep.subr.mxu0 0.0
          %368 = vmatpush1.msra.mxu0 0.0
          %369 = vmatprep.subr.mxu0 0.0
          %370 = vmatpush1.msra.mxu0 0.0
          %371 = vmatprep.subr.mxu0 0.0
          %372 = vmatpush1.msra.mxu0 0.0
          %373 = vmatprep.subr.mxu0 0.0
          %374 = vmatpush1.msra.mxu0 0.0
          %375 = vmatprep.subr.mxu0 0.0
          %376 = vmatpush1.msra.mxu0 0.0
          %377 = vmatprep.subr.mxu0 0.0
          %378 = vmatpush1.msra.mxu0 0.0
          %379 = vmatprep.subr.mxu0 0.0
          %380 = vmatpush1.msra.mxu0 0.0
          %381 = vmatprep.subr.mxu0 0.0
          %382 = vmatpush1.msra.mxu0 0.0
          %383 = vmatprep.subr.mxu0 0.0
          %384 = vmatpush1.msra.mxu0 0.0
          %385 = vmatprep.subr.mxu0 0.0
          %386 = vmatpush1.msra.mxu0 0.0
          %387 = vmatprep.subr.mxu0 0.0
          %388 = vmatpush1.msra.mxu0 0.0
          %389 = vmatprep.subr.mxu0 0.0
          %390 = vmatpush1.msra.mxu0 0.0
          %391 = vmatprep.subr.mxu0 0.0
          %392 = vmatpush1.msra.mxu0 0.0
          %393 = vmatprep.mubr.f32.mxu0 0.0
          %394 = vmatmul.mubr.f32.gmra.mrb[0].mxu0 %v328
          %v395 = vpop.f32.mrb[0].mxu0
          %v396 = vadd.f32 0.0, %v395
          %v397 = vpop.f32.mrb[0].mxu0
          %398 = vdwg.mxu0
          %v399 = vrcp.pop 256.0
          %v400 = vmul.f32 %v396, %v399
          %v401 = vld [vmem:[#allocation3] sm:$0x1]
          %402 = vmatprep.subr.mxu0 0.0
          %403 = vmatpush1.msra.mxu0 %v308
          %404 = vmatprep.subr.mxu0 0.0
          %405 = vmatpush1.msra.mxu0 %v309
          %406 = vmatprep.subr.mxu0 0.0
          %407 = vmatpush1.msra.mxu0 %v310
          %408 = vmatprep.subr.mxu0 0.0
          %409 = vmatpush1.msra.mxu0 %v311
          %410 = vmatprep.subr.mxu0 0.0
          %411 = vmatpush1.msra.mxu0 %v312
          %412 = vmatprep.subr.mxu0 0.0
          %413 = vmatpush1.msra.mxu0 %v313
          %414 = vmatprep.subr.mxu0 0.0
          %415 = vmatpush1.msra.mxu0 %v314
          %416 = vmatprep.subr.mxu0 0.0
          %417 = vmatpush1.msra.mxu0 %v315
          %418 = vmatprep.subr.mxu0 0.0
          %419 = vmatpush1.msra.mxu0 %v316
          %420 = vmatprep.subr.mxu0 0.0
          %421 = vmatpush1.msra.mxu0 %v317
          %422 = vmatprep.subr.mxu0 0.0
          %423 = vmatpush1.msra.mxu0 %v318
          %424 = vmatprep.subr.mxu0 0.0
          %425 = vmatpush1.msra.mxu0 %v319
          %426 = vmatprep.subr.mxu0 0.0
          %427 = vmatpush1.msra.mxu0 %v320
          %428 = vmatprep.subr.mxu0 0.0
          %429 = vmatpush1.msra.mxu0 %v321
          %430 = vmatprep.subr.mxu0 0.0
          %431 = vmatpush1.msra.mxu0 %v322
          %432 = vmatprep.subr.mxu0 0.0
          %433 = vmatpush1.msra.mxu0 %v323
          %434 = vmatprep.subr.mxu0 0.0
          %435 = vmatpush1.msra.mxu0 0.0
          %436 = vmatprep.subr.mxu0 0.0
          %437 = vmatpush1.msra.mxu0 0.0
          %438 = vmatprep.subr.mxu0 0.0
          %439 = vmatpush1.msra.mxu0 0.0
          %440 = vmatprep.subr.mxu0 0.0
          %441 = vmatpush1.msra.mxu0 0.0
          %442 = vmatprep.subr.mxu0 0.0
          %443 = vmatpush1.msra.mxu0 0.0
          %444 = vmatprep.subr.mxu0 0.0
          %445 = vmatpush1.msra.mxu0 0.0
          %446 = vmatprep.subr.mxu0 0.0
          %447 = vmatpush1.msra.mxu0 0.0
          %448 = vmatprep.subr.mxu0 0.0
          %449 = vmatpush1.msra.mxu0 0.0
          %450 = vmatprep.subr.mxu0 0.0
          %451 = vmatpush1.msra.mxu0 0.0
          %452 = vmatprep.subr.mxu0 0.0
          %453 = vmatpush1.msra.mxu0 0.0
          %454 = vmatprep.subr.mxu0 0.0
          %455 = vmatpush1.msra.mxu0 0.0
          %456 = vmatprep.subr.mxu0 0.0
          %457 = vmatpush1.msra.mxu0 0.0
          %458 = vmatprep.subr.mxu0 0.0
          %459 = vmatpush1.msra.mxu0 0.0
          %460 = vmatprep.subr.mxu0 0.0
          %461 = vmatpush1.msra.mxu0 0.0
          %462 = vmatprep.subr.mxu0 0.0
          %463 = vmatpush1.msra.mxu0 0.0
          %464 = vmatprep.subr.mxu0 0.0
          %465 = vmatpush1.msra.mxu0 0.0
          %466 = vmatprep.mubr.f32.mxu0 0.0
          %467 = vmatmul.mubr.f32.gmra.mrb[0].mxu0 %v401
          %v468 = vpop.f32.mrb[0].mxu0
          %v469 = vadd.f32 0.0, %v468
          %v470 = vpop.f32.mrb[0].mxu0
          %471 = vdwg.mxu0
          %v472 = vmul.f32 %v469, %v399
          %v473 = vmul.f32 %v400, %v400
          %v474 = vsub.f32 %v472, %v473
          %v475 = vadd.f32 %v474, 1e-05
          %v476 = vrsqrt.pop %v475
          %vm477 = vcmask 261120
          %v479 = vsel %vm477, %v400, 0
          %481 = vmatprep.subr.mxu0 0.0
          %482 = vmatpush1.msra.mxu0 %v324
          %483 = vmatprep.subr.mxu0 0.0
          %484 = vmatpush1.msra.mxu0 %v325
          %485 = vmatprep.subr.mxu0 0.0
          %486 = vmatpush1.msra.mxu0 %v326
          %487 = vmatprep.subr.mxu0 0.0
          %488 = vmatpush1.msra.mxu0 %v327
          %489 = vmatprep.subr.mxu0 0.0
          %490 = vmatpush1.msra.mxu0 0.0
          %491 = vmatprep.subr.mxu0 0.0
          %492 = vmatpush1.msra.mxu0 0.0
          %493 = vmatprep.subr.mxu0 0.0
          %494 = vmatpush1.msra.mxu0 0.0
          %495 = vmatprep.subr.mxu0 0.0
          %496 = vmatpush1.msra.mxu0 0.0
          %497 = vmatprep.subr.mxu0 0.0
          %498 = vmatpush1.msra.mxu0 0.0
          %499 = vmatprep.subr.mxu0 0.0
          %500 = vmatpush1.msra.mxu0 0.0
          %501 = vmatprep.subr.mxu0 0.0
          %502 = vmatpush1.msra.mxu0 0.0
          %503 = vmatprep.subr.mxu0 0.0
          %504 = vmatpush1.msra.mxu0 0.0
          %505 = vmatprep.subr.mxu0 0.0
          %506 = vmatpush1.msra.mxu0 0.0
          %507 = vmatprep.subr.mxu0 0.0
          %508 = vmatpush1.msra.mxu0 0.0
          %509 = vmatprep.subr.mxu0 0.0
          %510 = vmatpush1.msra.mxu0 0.0
          %511 = vmatprep.subr.mxu0 0.0
          %512 = vmatpush1.msra.mxu0 0.0
          %513 = vmatprep.subr.mxu0 0.0
          %514 = vmatpush1.msra.mxu0 0.0
          %515 = vmatprep.subr.mxu0 0.0
          %516 = vmatpush1.msra.mxu0 0.0
          %517 = vmatprep.subr.mxu0 0.0
          %518 = vmatpush1.msra.mxu0 0.0
          %519 = vmatprep.subr.mxu0 0.0
          %520 = vmatpush1.msra.mxu0 0.0
          %521 = vmatprep.subr.mxu0 0.0
          %522 = vmatpush1.msra.mxu0 0.0
          %523 = vmatprep.subr.mxu0 0.0
          %524 = vmatpush1.msra.mxu0 0.0
          %525 = vmatprep.subr.mxu0 0.0
          %526 = vmatpush1.msra.mxu0 0.0
          %527 = vmatprep.subr.mxu0 0.0
          %528 = vmatpush1.msra.mxu0 0.0
          %529 = vmatprep.subr.mxu0 0.0
          %530 = vmatpush1.msra.mxu0 0.0
          %531 = vmatprep.subr.mxu0 0.0
          %532 = vmatpush1.msra.mxu0 0.0
          %533 = vmatprep.subr.mxu0 0.0
          %534 = vmatpush1.msra.mxu0 0.0
          %535 = vmatprep.subr.mxu0 0.0
          %536 = vmatpush1.msra.mxu0 0.0
          %537 = vmatprep.subr.mxu0 0.0
          %538 = vmatpush1.msra.mxu0 0.0
          %539 = vmatprep.subr.mxu0 0.0
          %540 = vmatpush1.msra.mxu0 0.0
          %541 = vmatprep.subr.mxu0 0.0
          %542 = vmatpush1.msra.mxu0 0.0
          %543 = vmatprep.subr.mxu0 0.0
          %544 = vmatpush1.msra.mxu0 0.0
          %545 = vmatprep.mubr.f32.mxu0 0.0
          %546 = vmatmul.mubr.f32.gmra.mrb[0].mxu0 %v479
          %v547 = vpop.f32.mrb[0].mxu0
          %v548 = vadd.f32 0.0, %v547
          %v549 = vpop.f32.mrb[0].mxu0
          %550 = vdwg.mxu0
          %v552 = vsel %vm477, %v476, 0
          %554 = vmatprep.subr.mxu0 0.0
          %555 = vmatpush1.msra.mxu0 %v324
          %556 = vmatprep.subr.mxu0 0.0
          %557 = vmatpush1.msra.mxu0 %v325
          %558 = vmatprep.subr.mxu0 0.0
          %559 = vmatpush1.msra.mxu0 %v326
          %560 = vmatprep.subr.mxu0 0.0
          %561 = vmatpush1.msra.mxu0 %v327
          %562 = vmatprep.subr.mxu0 0.0
          %563 = vmatpush1.msra.mxu0 0.0
          %564 = vmatprep.subr.mxu0 0.0
          %565 = vmatpush1.msra.mxu0 0.0
          %566 = vmatprep.subr.mxu0 0.0
          %567 = vmatpush1.msra.mxu0 0.0
          %568 = vmatprep.subr.mxu0 0.0
          %569 = vmatpush1.msra.mxu0 0.0
          %570 = vmatprep.subr.mxu0 0.0
          %571 = vmatpush1.msra.mxu0 0.0
          %572 = vmatprep.subr.mxu0 0.0
          %573 = vmatpush1.msra.mxu0 0.0
          %574 = vmatprep.subr.mxu0 0.0
          %575 = vmatpush1.msra.mxu0 0.0
          %576 = vmatprep.subr.mxu0 0.0
          %577 = vmatpush1.msra.mxu0 0.0
          %578 = vmatprep.subr.mxu0 0.0
          %579 = vmatpush1.msra.mxu0 0.0
          %580 = vmatprep.subr.mxu0 0.0
          %581 = vmatpush1.msra.mxu0 0.0
          %582 = vmatprep.subr.mxu0 0.0
          %583 = vmatpush1.msra.mxu0 0.0
          %584 = vmatprep.subr.mxu0 0.0
          %585 = vmatpush1.msra.mxu0 0.0
          %586 = vmatprep.subr.mxu0 0.0
          %587 = vmatpush1.msra.mxu0 0.0
          %588 = vmatprep.subr.mxu0 0.0
          %589 = vmatpush1.msra.mxu0 0.0
          %590 = vmatprep.subr.mxu0 0.0
          %591 = vmatpush1.msra.mxu0 0.0
          %592 = vmatprep.subr.mxu0 0.0
          %593 = vmatpush1.msra.mxu0 0.0
          %594 = vmatprep.subr.mxu0 0.0
          %595 = vmatpush1.msra.mxu0 0.0
          %596 = vmatprep.subr.mxu0 0.0
          %597 = vmatpush1.msra.mxu0 0.0
          %598 = vmatprep.subr.mxu0 0.0
          %599 = vmatpush1.msra.mxu0 0.0
          %600 = vmatprep.subr.mxu0 0.0
          %601 = vmatpush1.msra.mxu0 0.0
          %602 = vmatprep.subr.mxu0 0.0
          %603 = vmatpush1.msra.mxu0 0.0
          %604 = vmatprep.subr.mxu0 0.0
          %605 = vmatpush1.msra.mxu0 0.0
          %606 = vmatprep.subr.mxu0 0.0
          %607 = vmatpush1.msra.mxu0 0.0
          %608 = vmatprep.subr.mxu0 0.0
          %609 = vmatpush1.msra.mxu0 0.0
          %610 = vmatprep.subr.mxu0 0.0
          %611 = vmatpush1.msra.mxu0 0.0
          %612 = vmatprep.subr.mxu0 0.0
          %613 = vmatpush1.msra.mxu0 0.0
          %614 = vmatprep.subr.mxu0 0.0
          %615 = vmatpush1.msra.mxu0 0.0
          %616 = vmatprep.subr.mxu0 0.0
          %617 = vmatpush1.msra.mxu0 0.0
          %618 = vmatprep.mubr.f32.mxu0 0.0
          %619 = vmatmul.mubr.f32.gmra.mrb[0].mxu0 %v552
          %v620 = vpop.f32.mrb[0].mxu0
          %v621 = vadd.f32 0.0, %v620
          %v622 = vpop.f32.mrb[0].mxu0
          %623 = vdwg.mxu0
          %v624 = vld [vmem:[%s1] sm:$0x1]
          %v625 = vmul.f32 %v621, %v624
          %v626 = vld [vmem:[%s2] sm:$0x1]
          %v627 = vmul.f32 %v548, %v625
          %v628 = vsub.f32 %v626, %v627
          %v630 = vlaneseq
          %v631 = vshrl.u32 %v630, 7
          %v632 = vsub.s32 0, %v631
          %v633 = vrot.slane %v628, %v632
          %vm635 = vcmask 1040384
          %v636 = vsel %vm635, %v625, %v633
          %637 = vst [vmem:[%s240] sm:$0x3] %v636
        $region48: #{tpu_custom_call.1} parent=39 // pred_fallthru
          _
        %s638 = sand.u32 %s151, 1
        %s639 = scalar_lea.sflag [#allocation5], %s638
        %s640 = sand.u32 %s151, 1
        %s641 = smul.addr %s640, 2
        %s642 = scalar_lea.vmem [#allocation4], %s641
        // Predicated region
        $region49: #{tpu_custom_call.1} parent=39 // pred_check
          %p643 = pneg %p161
        $region50: #{tpu_custom_call.1} parent=39 // pred_check_branch
          %645 = sbr.rel (%p643) target = $region52
        $region51: #{tpu_custom_call.1} parent=39 // pred_region
          %s647 = ssub.s32 32, 32
          %648 = vsyncadd %s639, %s647
          %s649 = smul.addr %s23, 32
          %s650 = scalar_lea.hbm %s5, %s649
          %s652 = sshll.u32 %s642, 4
          %s653 = int_to_ptr.vmem [resolvable:$true] %s652
          %655 = dma.vmem_to_hbm [thread:$0]  %s653, 32, %s650, %s639
        $region52: #{tpu_custom_call.1} parent=39 // pred_fallthru
          _
      $region40: #{tpu_custom_call.1} parent=5 // pred_fallthru
        _
      %p656 = scmp.le.s32.totalorder 2, %s14
      // Predicated region
      $region53: #{tpu_custom_call.1} parent=5 // pred_check
        %p657 = pneg %p656
      $region54: #{tpu_custom_call.1} parent=5 // pred_check_branch
        %659 = sbr.rel (%p657) target = $region56
      $region55: #{tpu_custom_call.1} parent=5 // pred_region
        %s660 = ssub.s32 %s14, 2
        // Predicated region
        $region57: #{tpu_custom_call.1} parent=55 // pred_check
          %p661 = pneg %p167
        $region58: #{tpu_custom_call.1} parent=55 // pred_check_branch
          %663 = sbr.rel (%p661) target = $region60
        $region59: #{tpu_custom_call.1} parent=55 // pred_region
          %s664 = sand.u32 %s152, 1
          %s665 = scalar_lea.sflag [#allocation5], %s664
          %s666 = sand.u32 %s152, 1
          %s667 = smul.addr %s666, 2
          %s668 = scalar_lea.vmem [#allocation4], %s667
          %669 = dma.done %s665, 32
        $region60: #{tpu_custom_call.1} parent=55 // pred_fallthru
          _
      $region56: #{tpu_custom_call.1} parent=5 // pred_fallthru
        _
    $region6: #{tpu_custom_call.1} parent=1 // loop_footer
      %s18 = sadd.s32 1, %s14
    $region7: #{tpu_custom_call.1} parent=1 // loop_footer_branch
      %13 = sbr.rel target = $region3
    $region8: #{tpu_custom_call.1} parent=1 // loop_exit
      _
    %670 = vsyncpa [#allocation5], 1
    %s671 = scalar_lea.sflag [#allocation5], 1
    %672 = vsyncpa %s671, 1

</llo_original>
